<compile_context>
chip_gen: v5e
topology: v5e:2x2
jax: 0.10.0
libtpu: 0.0.40
codegen_flags: <defaults>
</compile_context>

<pallas_src>
import functools

import jax
import jax.numpy as jnp
from jax.experimental import pallas as pl
from jax.experimental.pallas import tpu as pltpu


def _round_up(x, m):
    return ((x + m - 1) // m) * m


# -------- pass 1: streaming per-row sum / sum-of-squares over spatial tiles --------
def _stats_kernel(x_ref, sum_ref, sq_ref, *, hw, hw_tile, need_col_mask):
    # x_ref: (rows_tile, hw_tile); sum_ref / sq_ref: (rows_tile, 1) f32, resident
    # across the last ("arbitrary") HW grid axis -> accumulators.
    @pl.when(pl.program_id(1) == 0)
    def _():
        sum_ref[...] = jnp.zeros_like(sum_ref)
        sq_ref[...] = jnp.zeros_like(sq_ref)

    x = x_ref[...].astype(jnp.float32)
    if need_col_mask:
        # Last HW block may be partially out-of-bounds: zero out invalid lanes so
        # they do not perturb sum / sumsq (where() is a select, so garbage values
        # in the OOB region -- even NaN/Inf -- cannot propagate).
        col0 = pl.program_id(1) * hw_tile
        col = col0 + jax.lax.broadcasted_iota(jnp.int32, x.shape, dimension=1)
        x = jnp.where(col < hw, x, 0.0)
    sum_ref[...] += jnp.sum(x, axis=-1, keepdims=True)
    sq_ref[...] += jnp.sum(x * x, axis=-1, keepdims=True)


# -------- pass 2: per-row rescale (pure streaming, lane-dense stores) --------
def _apply_kernel(x_ref, s_ref, o_ref):
    # Out-of-bounds parts of partial output blocks are discarded by Pallas, so no
    # masking is needed here.
    o_ref[...] = (x_ref[...].astype(jnp.float32) * s_ref[...]).astype(o_ref.dtype)


def srm_forward(x_nchw, conv_w, bn_gamma, bn_beta, eps=1e-5):
    """x_nchw: (B, C, H, W); conv_w: (C, 1, 2); bn_gamma/bn_beta: (C,)."""
    B, C, H, W = x_nchw.shape
    rows = B * C
    hw = H * W
    in_dtype = x_nchw.dtype

    # Lane-dense tiles: multiple of 128 lanes (up to 1024), multiple of 8 rows.
    hw_tile = min(_round_up(hw, 128), 1024)
    rows_tile = min(_round_up(rows, 8), 256)
    grid = (pl.cdiv(rows, rows_tile), pl.cdiv(hw, hw_tile))
    need_col_mask = (hw % hw_tile) != 0

    x2 = x_nchw.reshape(rows, hw)  # contiguous -> free metadata reshape

    # ---- pass 1: per-row sum / sumsq ----
    sums, sqs = pl.pallas_call(
        functools.partial(_stats_kernel, hw=hw, hw_tile=hw_tile,
                          need_col_mask=need_col_mask),
        out_shape=(jax.ShapeDtypeStruct((rows, 1), jnp.float32),
                   jax.ShapeDtypeStruct((rows, 1), jnp.float32)),
        grid=grid,
        in_specs=[pl.BlockSpec((rows_tile, hw_tile), lambda i, j: (i, j))],
        out_specs=(pl.BlockSpec((rows_tile, 1), lambda i, j: (i, 0)),
                   pl.BlockSpec((rows_tile, 1), lambda i, j: (i, 0))),
        compiler_params=pltpu.CompilerParams(
            dimension_semantics=("parallel", "arbitrary")),
    )(x2)

    # ---- tiny O(B*C) epilogue in plain JAX: depthwise conv(k=2) + BN + sigmoid ----
    s = sums[:, 0].reshape(B, C)
    q = sqs[:, 0].reshape(B, C)
    mu = s / hw
    denom = max(hw - 1, 1)                                   # guard hw == 1
    var_unbiased = jnp.maximum(q - s * s / hw, 0.0) / denom  # clamp tiny negatives
    std = jnp.sqrt(var_unbiased)

    w = conv_w[:, 0, :].astype(jnp.float32)                  # (C, 2)
    z = mu * w[None, :, 0] + std * w[None, :, 1]             # (B, C)

    bm = jnp.mean(z, axis=0, keepdims=True)                  # BatchNorm1d (training)
    bv = jnp.mean(jnp.square(z - bm), axis=0, keepdims=True)  # biased
    z = (z - bm) * jax.lax.rsqrt(bv + eps)
    z = z * bn_gamma.astype(jnp.float32)[None, :] + bn_beta.astype(jnp.float32)[None, :]
    scale = jax.nn.sigmoid(z).reshape(rows, 1)               # (rows, 1) f32

    # ---- pass 2: stream x again and apply the per-row gate ----
    out2 = pl.pallas_call(
        _apply_kernel,
        out_shape=jax.ShapeDtypeStruct((rows, hw), in_dtype),
        grid=grid,
        in_specs=[pl.BlockSpec((rows_tile, hw_tile), lambda i, j: (i, j)),
                  pl.BlockSpec((rows_tile, 1), lambda i, j: (i, 0))],
        out_specs=pl.BlockSpec((rows_tile, hw_tile), lambda i, j: (i, j)),
        compiler_params=pltpu.CompilerParams(
            dimension_semantics=("parallel", "parallel")),
    )(x2, scale)

    return out2.reshape(B, C, H, W)


def srm_reference(x_nchw, conv_w, bn_gamma, bn_beta, eps=1e-5):
    """Pure-JAX reference mirroring the PyTorch forward (training-mode BN)."""
    B, C, H, W = x_nchw.shape
    x = x_nchw.astype(jnp.float32)
    mu = jnp.mean(x, axis=(-2, -1))                          # (B, C)
    std = jnp.std(x.reshape(B, C, -1), axis=-1, ddof=1)      # unbiased
    w = conv_w[:, 0, :].astype(jnp.float32)                  # (C, 2)
    z = mu * w[None, :, 0] + std * w[None, :, 1]
    bm = jnp.mean(z, axis=0, keepdims=True)
    bv = jnp.mean((z - bm) ** 2, axis=0, keepdims=True)
    z = (z - bm) / jnp.sqrt(bv + eps)
    z = z * bn_gamma[None, :] + bn_beta[None, :]
    scale = jax.nn.sigmoid(z)
    return x * scale[:, :, None, None]


# TODO(synk): use_mlp=True branch (2-layer MLP style integration) not implemented;
# module default (use_mlp=False, depthwise Conv1d) is what this kernel covers.

if __name__ == "__main__":
    B, C, H, W = 2, 4, 16, 16
    key = jax.random.PRNGKey(0)
    kx, kw = jax.random.split(key)

    x = jax.random.normal(kx, (B, C, H, W), dtype=jnp.float32)
    # Conv1d(in=C, out=C, kernel_size=2, groups=C, bias=False) -> weight (C, 1, 2)
    conv_w = jax.random.normal(kw, (C, 1, 2), dtype=jnp.float32) * 0.5
    bn_gamma = jnp.ones((C,), dtype=jnp.float32)   # BatchNorm1d default init
    bn_beta = jnp.zeros((C,), dtype=jnp.float32)

    fwd = jax.jit(srm_forward)
    out = jax.block_until_ready(fwd(x, conv_w, bn_gamma, bn_beta))
    ref = srm_reference(x, conv_w, bn_gamma, bn_beta)
    assert out.shape == (B, C, H, W)
    assert jnp.allclose(out, ref, atol=1e-4, rtol=1e-4), "mismatch vs reference"

    # Second shape where HW is NOT a multiple of 128 and rows not a multiple of
    # rows_tile -> exercises the partial-block / column-mask path.
    x2 = jax.random.normal(jax.random.PRNGKey(1), (3, 5, 24, 24), dtype=jnp.float32)
    cw2 = jax.random.normal(jax.random.PRNGKey(2), (5, 1, 2), dtype=jnp.float32) * 0.5
    g2 = jnp.ones((5,), jnp.float32)
    b2 = jnp.zeros((5,), jnp.float32)
    out2 = jax.block_until_ready(fwd(x2, cw2, g2, b2))
    ref2 = srm_reference(x2, cw2, g2, b2)
    assert jnp.allclose(out2, ref2, atol=1e-4, rtol=1e-4), "mismatch (partial blocks)"

    print("KERNEL_OK")
</pallas_src>

<mosaic_0001>
module attributes {stable_mosaic.version = 11 : i64} {
  func.func @_stats_kernel(%arg0: i32, %arg1: i32, %arg2: memref<8x256xf32, #tpu.memory_space<vmem>>, %arg3: memref<8x1xf32, #tpu.memory_space<vmem>>, %arg4: memref<8x1xf32, #tpu.memory_space<vmem>>) attributes {dimension_semantics = [#tpu.dimension_semantics<parallel>, #tpu.dimension_semantics<arbitrary>], iteration_bounds = array<i64: 1, 1>, scalar_prefetch = 0 : i64, scratch_operands = 0 : i64, tpu.core_type = #tpu.core_type<tc>, window_params = [{transform_indices = @transform_0, window_bounds = array<i64: 8, 256>}, {transform_indices = @transform_1, window_bounds = array<i64: 8, 1>}, {transform_indices = @transform_2, window_bounds = array<i64: 8, 1>}]} {
    %c0_i32 = arith.constant 0 : i32
    %0 = arith.cmpi eq, %arg1, %c0_i32 : i32
    %1 = arith.extui %0 : i1 to i32
    %c0_i32_0 = arith.constant 0 : i32
    %2 = arith.cmpi ne, %1, %c0_i32_0 : i32
    scf.if %2 {
      %cst_11 = arith.constant 0.000000e+00 : f32
      %15 = vector.broadcast %cst_11 : f32 to vector<8x1xf32>
      %c0_12 = arith.constant 0 : index
      %c0_13 = arith.constant 0 : index
      %16 = vector.load %arg3[%c0_12, %c0_13] : memref<8x1xf32, #tpu.memory_space<vmem>>, vector<8x1xf32>
      tpu.vector_store %arg3[%c0_12, %c0_13], %15 {strides = array<i32>} : memref<8x1xf32, #tpu.memory_space<vmem>>, vector<8x1xf32>,
      %cst_14 = arith.constant 0.000000e+00 : f32
      %17 = vector.broadcast %cst_14 : f32 to vector<8x1xf32>
      %c0_15 = arith.constant 0 : index
      %c0_16 = arith.constant 0 : index
      %18 = vector.load %arg4[%c0_15, %c0_16] : memref<8x1xf32, #tpu.memory_space<vmem>>, vector<8x1xf32>
      tpu.vector_store %arg4[%c0_15, %c0_16], %17 {strides = array<i32>} : memref<8x1xf32, #tpu.memory_space<vmem>>, vector<8x1xf32>,
    } else {
    }
    %c0 = arith.constant 0 : index
    %c0_1 = arith.constant 0 : index
    %3 = vector.load %arg2[%c0, %c0_1] : memref<8x256xf32, #tpu.memory_space<vmem>>, vector<8x256xf32>
    %c0_2 = arith.constant 0 : index
    %c0_3 = arith.constant 0 : index
    %4 = vector.load %arg3[%c0_2, %c0_3] : memref<8x1xf32, #tpu.memory_space<vmem>>, vector<8x1xf32>
    %cst = arith.constant dense<0.000000e+00> : vector<8xf32>
    %5 = vector.multi_reduction <add>, %3, %cst [1] : vector<8x256xf32> to vector<8xf32>
    %6 = vector.shape_cast %5 : vector<8xf32> to vector<8x1xf32>
    %7 = arith.addf %4, %6 : vector<8x1xf32>
    %c0_4 = arith.constant 0 : index
    %c0_5 = arith.constant 0 : index
    %8 = vector.load %arg3[%c0_4, %c0_5] : memref<8x1xf32, #tpu.memory_space<vmem>>, vector<8x1xf32>
    tpu.vector_store %arg3[%c0_4, %c0_5], %7 {strides = array<i32>} : memref<8x1xf32, #tpu.memory_space<vmem>>, vector<8x1xf32>,
    %c0_6 = arith.constant 0 : index
    %c0_7 = arith.constant 0 : index
    %9 = vector.load %arg4[%c0_6, %c0_7] : memref<8x1xf32, #tpu.memory_space<vmem>>, vector<8x1xf32>
    %10 = arith.mulf %3, %3 : vector<8x256xf32>
    %cst_8 = arith.constant dense<0.000000e+00> : vector<8xf32>
    %11 = vector.multi_reduction <add>, %10, %cst_8 [1] : vector<8x256xf32> to vector<8xf32>
    %12 = vector.shape_cast %11 : vector<8xf32> to vector<8x1xf32>
    %13 = arith.addf %9, %12 : vector<8x1xf32>
    %c0_9 = arith.constant 0 : index
    %c0_10 = arith.constant 0 : index
    %14 = vector.load %arg4[%c0_9, %c0_10] : memref<8x1xf32, #tpu.memory_space<vmem>>, vector<8x1xf32>
    tpu.vector_store %arg4[%c0_9, %c0_10], %13 {strides = array<i32>} : memref<8x1xf32, #tpu.memory_space<vmem>>, vector<8x1xf32>,
    return
  }
  func.func @transform_0(%arg0: i32, %arg1: i32) -> (i32, i32) {
    %c0_i32 = arith.constant 0 : i32
    return %arg0, %arg1 : i32, i32
  }
  func.func @transform_1(%arg0: i32, %arg1: i32) -> (i32, i32) {
    %c0_i32 = arith.constant 0 : i32
    %c0_i32_0 = arith.constant 0 : i32
    return %arg0, %c0_i32 : i32, i32
  }
  func.func @transform_2(%arg0: i32, %arg1: i32) -> (i32, i32) {
    %c0_i32 = arith.constant 0 : i32
    %c0_i32_0 = arith.constant 0 : i32
    return %arg0, %c0_i32 : i32, i32
  }
}

module attributes {stable_mosaic.version = 11 : i64} {
  func.func @_apply_kernel(%arg0: i32, %arg1: i32, %arg2: memref<8x256xf32, #tpu.memory_space<vmem>>, %arg3: memref<8x1xf32, #tpu.memory_space<vmem>>, %arg4: memref<8x256xf32, #tpu.memory_space<vmem>>) attributes {dimension_semantics = [#tpu.dimension_semantics<parallel>, #tpu.dimension_semantics<parallel>], iteration_bounds = array<i64: 1, 1>, scalar_prefetch = 0 : i64, scratch_operands = 0 : i64, tpu.core_type = #tpu.core_type<tc>, window_params = [{transform_indices = @transform_0, window_bounds = array<i64: 8, 256>}, {transform_indices = @transform_1, window_bounds = array<i64: 8, 1>}, {transform_indices = @transform_2, window_bounds = array<i64: 8, 256>}]} {
    %c0 = arith.constant 0 : index
    %c0_0 = arith.constant 0 : index
    %0 = vector.load %arg2[%c0, %c0_0] : memref<8x256xf32, #tpu.memory_space<vmem>>, vector<8x256xf32>
    %c0_1 = arith.constant 0 : index
    %c0_2 = arith.constant 0 : index
    %1 = vector.load %arg3[%c0_1, %c0_2] : memref<8x1xf32, #tpu.memory_space<vmem>>, vector<8x1xf32>
    %2 = vector.broadcast %1 : vector<8x1xf32> to vector<8x256xf32>
    %3 = arith.mulf %0, %2 : vector<8x256xf32>
    %c0_3 = arith.constant 0 : index
    %c0_4 = arith.constant 0 : index
    %4 = vector.load %arg4[%c0_3, %c0_4] : memref<8x256xf32, #tpu.memory_space<vmem>>, vector<8x256xf32>
    tpu.vector_store %arg4[%c0_3, %c0_4], %3 {strides = array<i32>} : memref<8x256xf32, #tpu.memory_space<vmem>>, vector<8x256xf32>,
    return
  }
  func.func @transform_0(%arg0: i32, %arg1: i32) -> (i32, i32) {
    %c0_i32 = arith.constant 0 : i32
    return %arg0, %arg1 : i32, i32
  }
  func.func @transform_1(%arg0: i32, %arg1: i32) -> (i32, i32) {
    %c0_i32 = arith.constant 0 : i32
    %c0_i32_0 = arith.constant 0 : i32
    return %arg0, %c0_i32 : i32, i32
  }
  func.func @transform_2(%arg0: i32, %arg1: i32) -> (i32, i32) {
    %c0_i32 = arith.constant 0 : i32
    return %arg0, %arg1 : i32, i32
  }
}

</mosaic_0001>

<llo_original>
// kernel: squeeze.5
$region0: #{squeeze.5}
  %s0 = inlined_call_operand.vmem [shape: f32[8], index: 0, kind: input, shape index: {}]
  %s1 = inlined_call_operand.vmem [shape: f32[2,4], index: 1, kind: output, shape index: {}]
  $region1: #{squeeze.5} parent=0
    #allocation0 [shape = 'u8[4096]{0}', space=vmem, size = 0x1000, scoped, tag = 'scoped mem for output reshape']
    #allocation1 [shape = 'u8[4096]{0}', space=vmem, size = 0x1000, scoped, tag = 'scoped mem for input reshape']
    %s3 = ssub.s32 2, 1
    %v4 = vld [vmem:[%s0] sm:%s3]
    %5 = vst [vmem:[#allocation1] sm:%s3] %v4
    %v6 = vld [vmem:[#allocation1] sm:$0x1]
    %vm7 = vcmask 31744
    %8 = vst.msk [vmem:[#allocation0] sm:$0x1] %vm7, %v6
    %v9 = vld [vmem:[#allocation1] sm:$0x1]
    %10 = vrot.lane.b32.xlu0 %v9, 124
    %v11 = vpop.permute.xlu0 %10
    %vm12 = vcmask 31744
    %s13 = scalar_lea.vmem [#allocation0], 1
    %14 = vst.msk [vmem:[%s13] sm:$0x1] %vm12, %v11
    %s16 = ssub.s32 4, 1
    %v17 = vld [vmem:[#allocation0] sm:%s16]
    %s19 = ssub.s32 4, 1
    %20 = vst [vmem:[%s1] sm:%s19] %v17

// kernel: srm_forward.3
$region0: #{srm_forward.3}
  #allocation0 [shape = 'u32[]', space=smem, size = 0x4, offset = 0x4, fixed_abs, tag = 'smem constant byte address 0x4 - core index']
  #allocation1 [shape = 'u32[72,128]{1,0:T(1,128)}', space=vmem, size = 0x9000, scoped, tag = 'internal scratch']
  %s0 = inlined_call_operand.vmem [shape: f32[8,256], index: 0, kind: input, shape index: {}]
  %s1 = inlined_call_operand.vmem [shape: f32[8,1], index: 1, kind: input, shape index: {}]
  %s2 = inlined_call_operand.vmem [shape: f32[8,256], index: 2, kind: output, shape index: {}]
  %s3 = sld [smem:[#allocation0]]
  $region18: #{srm_forward.3} parent=0
    _
  %s5 = ssub.s32 1, %s3
  %s6 = scalar_select 0, %s5, %s3
  // Predicated region
  $region2: #{srm_forward.3} parent=0 // pred_check
    _
  $region3: #{srm_forward.3} parent=0 // pred_check_branch
    %8 = sbr.rel (0) target = $region5
  $region4: #{srm_forward.3} parent=0 // pred_region
    _
  $region5: #{srm_forward.3} parent=0 // pred_fallthru
    _
  // Predicated region
  $region6: #{srm_forward.3} parent=0 // pred_check
    _
  $region7: #{srm_forward.3} parent=0 // pred_check_branch
    %10 = sbr.rel (0) target = $region9
  $region8: #{srm_forward.3} parent=0 // pred_region
    _
  $region9: #{srm_forward.3} parent=0 // pred_fallthru
    _
  %v11 = vld [vmem:[%s0] sm:$0xff]
  %v12 = vld [vmem:[%s0 + $0x8] sm:$0xff]
  %v13 = vld [vmem:[%s1] sm:$0xff]
  %15 = vset.pattern.permute.xlu0 0
  %16 = vperm.xlu0 %15, %v13
  %v17 = vpop.permute.xlu0 %16
  %v19 = vmul.f32 %v11, %v17
  %v20 = vmul.f32 %v12, %v17
  %21 = vst [vmem:[%s2] sm:$0xff] %v19
  %22 = vst [vmem:[%s2 + $0x8] sm:$0xff] %v20
  // Predicated region
  $region10: #{srm_forward.3} parent=0 // pred_check
    _
  $region11: #{srm_forward.3} parent=0 // pred_check_branch
    %24 = sbr.rel (0) target = $region13
  $region12: #{srm_forward.3} parent=0 // pred_region
    _
  $region13: #{srm_forward.3} parent=0 // pred_fallthru
    _
  // Predicated region
  $region14: #{srm_forward.3} parent=0 // pred_check
    _
  $region15: #{srm_forward.3} parent=0 // pred_check_branch
    %26 = sbr.rel (0) target = $region17
  $region16: #{srm_forward.3} parent=0 // pred_region
    _
  $region17: #{srm_forward.3} parent=0 // pred_fallthru
    _

// kernel: srm_forward.2
$region0: #{srm_forward.2}
  #allocation0 [shape = 'u32[]', space=smem, size = 0x4, offset = 0x4, fixed_abs, tag = 'smem constant byte address 0x4 - core index']
  #allocation1 [shape = 'u32[72,128]{1,0:T(1,128)}', space=vmem, size = 0x9000, scoped, tag = 'internal scratch']
  %s0 = inlined_call_operand.vmem [shape: f32[8,256], index: 0, kind: input, shape index: {}]
  %s1 = inlined_call_operand.vmem [shape: f32[8,1], index: 1, kind: output, shape index: {0}]
  %s2 = inlined_call_operand.vmem [shape: f32[8,1], index: 2, kind: output, shape index: {1}]
  %3 = xla_tuple %s1, %s2
  %s4 = sld [smem:[#allocation0]]
  $region26: #{srm_forward.2} parent=0
    _
  %s6 = ssub.s32 1, %s4
  %s7 = scalar_select 0, %s6, %s4
  // Predicated region
  $region2: #{srm_forward.2} parent=0 // pred_check
    _
  $region3: #{srm_forward.2} parent=0 // pred_check_branch
    %9 = sbr.rel (0) target = $region5
  $region4: #{srm_forward.2} parent=0 // pred_region
    _
  $region5: #{srm_forward.2} parent=0 // pred_fallthru
    _
  %p10 = scmp.eq.s32.totalorder 0, 0
  // Predicated region
  $region6: #{srm_forward.2} parent=0 // pred_check
    %p11 = pneg %p10
  $region7: #{srm_forward.2} parent=0 // pred_check_branch
    %13 = sbr.rel (%p11) target = $region9
  $region8: #{srm_forward.2} parent=0 // pred_region
    %vm14 = vcmask 7168
    %15 = vst.msk [vmem:[%s1] sm:$0xff] %vm14, 0.0
    %16 = vst.msk [vmem:[%s2] sm:$0xff] %vm14, 0.0
  $region9: #{srm_forward.2} parent=0 // pred_fallthru
    _
  %v17 = vld [vmem:[%s0] sm:$0xff]
  %v18 = vld [vmem:[%s0 + $0x8] sm:$0xff]
  %v19 = vld [vmem:[%s1] sm:$0xff]
  %v20 = vadd.f32 %v17, %v18
  %21 = vadd.xlane.f32.xlu0 %v20
  %v22 = vpop.xlane.xlu0 %21
  %v23 = vadd.f32 %v19, %v22
  %vm24 = vcmask 7168
  %25 = vst.msk [vmem:[%s1] sm:$0xff] %vm24, %v23
  %v26 = vld [vmem:[%s2] sm:$0xff]
  %v27 = vmul.f32 %v17, %v17
  %v28 = vmul.f32 %v18, %v18
  %v29 = vadd.f32 %v27, %v28
  %30 = vadd.xlane.f32.xlu0 %v29
  %v31 = vpop.xlane.xlu0 %30
  %v32 = vadd.f32 %v26, %v31
  %33 = vst.msk [vmem:[%s2] sm:$0xff] %vm24, %v32
  // Predicated region
  $region10: #{srm_forward.2} parent=0 // pred_check
    _
  $region11: #{srm_forward.2} parent=0 // pred_check_branch
    %35 = sbr.rel (0) target = $region13
  $region12: #{srm_forward.2} parent=0 // pred_region
    _
  $region13: #{srm_forward.2} parent=0 // pred_fallthru
    _
  // Predicated region
  $region14: #{srm_forward.2} parent=0 // pred_check
    _
  $region15: #{srm_forward.2} parent=0 // pred_check_branch
    %37 = sbr.rel (0) target = $region17
  $region16: #{srm_forward.2} parent=0 // pred_region
    _
  $region17: #{srm_forward.2} parent=0 // pred_fallthru
    _
  // Predicated region
  $region18: #{srm_forward.2} parent=0 // pred_check
    _
  $region19: #{srm_forward.2} parent=0 // pred_check_branch
    %39 = sbr.rel (0) target = $region21
  $region20: #{srm_forward.2} parent=0 // pred_region
    _
  $region21: #{srm_forward.2} parent=0 // pred_fallthru
    _
  // Predicated region
  $region22: #{srm_forward.2} parent=0 // pred_check
    _
  $region23: #{srm_forward.2} parent=0 // pred_check_branch
    %41 = sbr.rel (0) target = $region25
  $region24: #{srm_forward.2} parent=0 // pred_region
    _
  $region25: #{srm_forward.2} parent=0 // pred_fallthru
    _

</llo_original>
